<compile_context>
chip_gen: v6e
topology: v6e:2x2x1
jax: 0.10.0
libtpu: 0.0.40
codegen_flags: <defaults>
</compile_context>

<pallas_src>
import math

import jax
import jax.numpy as jnp
from jax import lax
from jax.experimental import pallas as pl
from jax.experimental.pallas import tpu as pltpu

_INV_SQRT2 = 0.7071067811865476
_N_OUT = 4        # liquidity, price_stability, market_depth, trading_volume
_MXU_LANES = 128  # final projection zero-padded to one clean 128-lane MXU pass


def _cdiv(a, b):
    return (a + b - 1) // b


def _round_up(a, b):
    return _cdiv(a, b) * b


def _gelu_exact(x):
    # PyTorch nn.GELU() default = exact erf formulation (multiply, not divide).
    return 0.5 * x * (1.0 + lax.erf(x * _INV_SQRT2))


def _layernorm(h, gamma, beta, eps=1e-5):
    # Two-pass LayerNorm (variance of centered values) — matches PyTorch and
    # avoids E[h^2]-mu^2 cancellation; cost is negligible (kernel is HBM-bound).
    mu = jnp.mean(h, axis=-1, keepdims=True)
    d = h - mu
    var = jnp.mean(d * d, axis=-1, keepdims=True)
    return d * (lax.rsqrt(var + eps) * gamma) + beta


def market_efficiency_kernel(
    x_ref,
    w1_ref, b1_ref, g1_ref, be1_ref,
    w2_ref, b2_ref, g2_ref, be2_ref,
    w3_ref, b3_ref,
    o_ref,
):
    x = x_ref[...].astype(jnp.float32)

    # Block 1: Linear -> LayerNorm -> GELU   (Dropout(0.2) is identity in eval)
    h = jnp.dot(x, w1_ref[...], preferred_element_type=jnp.float32) + b1_ref[...]
    h = _gelu_exact(_layernorm(h, g1_ref[...], be1_ref[...]))

    # Block 2: Linear -> LayerNorm -> GELU
    h = jnp.dot(h, w2_ref[...], preferred_element_type=jnp.float32) + b2_ref[...]
    h = _gelu_exact(_layernorm(h, g2_ref[...], be2_ref[...]))

    # Final projection: one clean 128-lane MXU pass on zero-padded weights, then
    # drop the padding *before* the activations/store so only the 4 real columns
    # are written back to HBM (16 B/row instead of 512 B/row).
    pred = jnp.dot(h, w3_ref[...], preferred_element_type=jnp.float32)
    pred = pred[:, :_N_OUT] + b3_ref[...]

    # cols 0,1 -> sigmoid ; cols 2,3 -> softplus.  At vreg granularity the 4-wide
    # tile occupies a single 128-lane group per 8 rows, so selecting between the
    # two branches here costs the same EUP work as 2-column splits while keeping
    # the store a single dense op (the real win was dropping the 128-lane pad).
    col = lax.broadcasted_iota(jnp.int32, pred.shape, 1)
    o_ref[...] = jnp.where(
        col < 2, jax.nn.sigmoid(pred), jax.nn.softplus(pred)
    ).astype(o_ref.dtype)


def _vmem_limit_bytes():
    # Generation-aware VMEM request: ~75% of physical capacity.
    #   v5e/v6e: 128 MiB -> 96 MiB ;  v7x: 64 MiB -> 48 MiB.
    try:
        cap = int(pltpu.get_tpu_info().vmem_capacity_bytes)
    except Exception:
        cap = 0
    if cap <= 0:
        cap = 64 * 1024 * 1024  # conservative fallback, safe on every generation
    return (cap * 3) // 4


def _pick_batch_tile(B, in_dim, H, H2, weight_bytes, vmem_limit):
    # Biggest batch tile that fits: double-buffered x/out blocks + live f32
    # intermediates + (double-buffered by default) resident weights within ~60%
    # of the VMEM request.  Per-grid-step overhead is ~0.35 us, so bigger tiles
    # directly reduce wall time on this HBM-bound kernel.
    budget = int(0.6 * vmem_limit) - 2 * weight_bytes
    per_row_bytes = 4 * (
        2 * in_dim                       # x block (double-buffered)
        + 2 * _N_OUT                     # output block (double-buffered)
        + in_dim + H + H2 + _MXU_LANES   # live f32 intermediates per row
    )
    tb = budget // max(per_row_bytes, 1)
    tb = max(8, min(8192, tb))
    tb = (tb // 8) * 8
    tb = min(tb, _round_up(B, 8))        # never tile beyond the (padded) batch
    # v7x megacore: the "parallel" batch axis only spans both TensorCores if the
    # grid has >= 2 steps; halve the tile if it would otherwise be a single step.
    if _cdiv(_round_up(B, 8), tb) < 2 and tb > 8:
        tb = max(8, (_cdiv(tb, 2) // 8) * 8)
    return tb


def market_efficiency_head(x, params, *, tb=None):
    """x: [B, input_dim] float32.  Returns dict of 4 arrays of shape [B]."""
    B, in_dim = x.shape
    (w1, b1, g1, be1, w2, b2, g2, be2, w3, b3) = params
    H = w1.shape[1]
    H2 = w2.shape[1]

    # Lane-dense final matmul: pad w3 from 4 to 128 output columns.  The bias
    # stays 4-wide; the kernel slices the padding away before the store.
    w3p = jnp.pad(w3, ((0, 0), (0, _MXU_LANES - w3.shape[1])))

    weights = (w1, b1, g1, be1, w2, b2, g2, be2, w3p, b3)
    weight_bytes = sum(int(a.size) * a.dtype.itemsize for a in weights)

    vmem_limit = _vmem_limit_bytes()
    if tb is None:
        tb = _pick_batch_tile(B, in_dim, H, H2, weight_bytes, vmem_limit)
    Bp = _round_up(B, tb)
    if Bp != B:
        x = jnp.pad(x, ((0, Bp - B), (0, 0)))
    nb = Bp // tb

    def resident(a):
        # Constant index_map -> same block every grid step -> stays in VMEM.
        # TODO(synk): pipeline_mode=pl.Buffered(1) would single-buffer these;
        # instead we subtract 2*weight_bytes from the tile budget above.
        return pl.BlockSpec(a.shape, lambda i: (0,) * a.ndim)

    flops = 2 * Bp * (in_dim * H + H * H2 + H2 * _MXU_LANES)
    transcendentals = Bp * (H + H2 + _N_OUT)
    bytes_accessed = Bp * in_dim * 4 + Bp * _N_OUT * 4 + weight_bytes

    out = pl.pallas_call(
        market_efficiency_kernel,
        out_shape=jax.ShapeDtypeStruct((Bp, _N_OUT), jnp.float32),
        grid_spec=pltpu.PrefetchScalarGridSpec(
            num_scalar_prefetch=0,
            grid=(nb,),
            in_specs=[
                pl.BlockSpec((tb, in_dim), lambda i: (i, 0)),
                resident(w1), resident(b1), resident(g1), resident(be1),
                resident(w2), resident(b2), resident(g2), resident(be2),
                resident(w3p), resident(b3),
            ],
            out_specs=pl.BlockSpec((tb, _N_OUT), lambda i: (i, 0)),
        ),
        compiler_params=pltpu.CompilerParams(
            dimension_semantics=("parallel",),
            vmem_limit_bytes=vmem_limit,
        ),
        cost_estimate=pl.CostEstimate(
            flops=flops,
            transcendentals=transcendentals,
            bytes_accessed=bytes_accessed,
        ),
    )(x, *weights)

    out = out[:B]
    return {
        "liquidity": out[:, 0],
        "price_stability": out[:, 1],
        "market_depth": out[:, 2],
        "trading_volume": out[:, 3],
    }


def init_params(key, input_dim, hidden_dim):
    """Deterministic synthetic parameters (shapes match the PyTorch module)."""
    h2 = hidden_dim // 2
    ks = jax.random.split(key, 6)

    def linear(kw, kb, fan_in, fan_out):
        bound = 1.0 / math.sqrt(fan_in)
        w = jax.random.uniform(kw, (fan_in, fan_out), jnp.float32, -bound, bound)
        b = jax.random.uniform(kb, (1, fan_out), jnp.float32, -bound, bound)
        return w, b

    w1, b1 = linear(ks[0], ks[1], input_dim, hidden_dim)
    w2, b2 = linear(ks[2], ks[3], hidden_dim, h2)
    w3, b3 = linear(ks[4], ks[5], h2, 4)

    g1 = jnp.ones((1, hidden_dim), jnp.float32)
    be1 = jnp.zeros((1, hidden_dim), jnp.float32)
    g2 = jnp.ones((1, h2), jnp.float32)
    be2 = jnp.zeros((1, h2), jnp.float32)

    return (w1, b1, g1, be1, w2, b2, g2, be2, w3, b3)


def reference(x, params):
    """Pure-JAX reference of the same forward pass (eval mode)."""
    (w1, b1, g1, be1, w2, b2, g2, be2, w3, b3) = params
    hp = lax.Precision.HIGHEST
    h = jnp.dot(x, w1, precision=hp) + b1
    h = _gelu_exact(_layernorm(h, g1, be1))
    h = jnp.dot(h, w2, precision=hp) + b2
    h = _gelu_exact(_layernorm(h, g2, be2))
    p = jnp.dot(h, w3, precision=hp) + b3
    return {
        "liquidity": jax.nn.sigmoid(p[:, 0]),
        "price_stability": jax.nn.sigmoid(p[:, 1]),
        "market_depth": jax.nn.softplus(p[:, 2]),
        "trading_volume": jax.nn.softplus(p[:, 3]),
    }


if __name__ == "__main__":
    B, INPUT_DIM, HIDDEN_DIM = 8, 32, 32

    key = jax.random.PRNGKey(0)
    kx, kp = jax.random.split(key)
    x = jax.random.normal(kx, (B, INPUT_DIM), jnp.float32)
    params = init_params(kp, INPUT_DIM, HIDDEN_DIM)

    out = market_efficiency_head(x, params)
    out = jax.tree_util.tree_map(jax.block_until_ready, out)

    ref = reference(x, params)
    for name in ("liquidity", "price_stability", "market_depth", "trading_volume"):
        assert out[name].shape == (B,), name
        assert jnp.allclose(out[name], ref[name], atol=1e-4, rtol=1e-4), name

    print("KERNEL_OK")
</pallas_src>

<mosaic_0001>
module attributes {stable_mosaic.version = 11 : i64} {
  func.func @market_efficiency_kernel(%arg0: i32, %arg1: memref<8x32xf32, #tpu.memory_space<vmem>>, %arg2: memref<32x32xf32, #tpu.memory_space<vmem>>, %arg3: memref<1x32xf32, #tpu.memory_space<vmem>>, %arg4: memref<1x32xf32, #tpu.memory_space<vmem>>, %arg5: memref<1x32xf32, #tpu.memory_space<vmem>>, %arg6: memref<32x16xf32, #tpu.memory_space<vmem>>, %arg7: memref<1x16xf32, #tpu.memory_space<vmem>>, %arg8: memref<1x16xf32, #tpu.memory_space<vmem>>, %arg9: memref<1x16xf32, #tpu.memory_space<vmem>>, %arg10: memref<16x128xf32, #tpu.memory_space<vmem>>, %arg11: memref<1x4xf32, #tpu.memory_space<vmem>>, %arg12: memref<8x4xf32, #tpu.memory_space<vmem>>) attributes {dimension_semantics = [#tpu.dimension_semantics<parallel>], iteration_bounds = array<i64: 1>, scalar_prefetch = 0 : i64, scratch_operands = 0 : i64, tpu.core_type = #tpu.core_type<tc>, window_params = [{transform_indices = @transform_0, window_bounds = array<i64: 8, 32>}, {pipeline_mode = #tpu.pipeline_mode<synchronous>, transform_indices = @transform_1, window_bounds = array<i64: 32, 32>}, {pipeline_mode = #tpu.pipeline_mode<synchronous>, transform_indices = @transform_2, window_bounds = array<i64: 1, 32>}, {pipeline_mode = #tpu.pipeline_mode<synchronous>, transform_indices = @transform_3, window_bounds = array<i64: 1, 32>}, {pipeline_mode = #tpu.pipeline_mode<synchronous>, transform_indices = @transform_4, window_bounds = array<i64: 1, 32>}, {pipeline_mode = #tpu.pipeline_mode<synchronous>, transform_indices = @transform_5, window_bounds = array<i64: 32, 16>}, {pipeline_mode = #tpu.pipeline_mode<synchronous>, transform_indices = @transform_6, window_bounds = array<i64: 1, 16>}, {pipeline_mode = #tpu.pipeline_mode<synchronous>, transform_indices = @transform_7, window_bounds = array<i64: 1, 16>}, {pipeline_mode = #tpu.pipeline_mode<synchronous>, transform_indices = @transform_8, window_bounds = array<i64: 1, 16>}, {pipeline_mode = #tpu.pipeline_mode<synchronous>, transform_indices = @transform_9, window_bounds = array<i64: 16, 128>}, {pipeline_mode = #tpu.pipeline_mode<synchronous>, transform_indices = @transform_10, window_bounds = array<i64: 1, 4>}, {transform_indices = @transform_11, window_bounds = array<i64: 8, 4>}]} {
    %c0 = arith.constant 0 : index
    %c0_0 = arith.constant 0 : index
    %0 = vector.load %arg1[%c0, %c0_0] : memref<8x32xf32, #tpu.memory_space<vmem>>, vector<8x32xf32>
    %c0_1 = arith.constant 0 : index
    %c0_2 = arith.constant 0 : index
    %1 = vector.load %arg2[%c0_1, %c0_2] : memref<32x32xf32, #tpu.memory_space<vmem>>, vector<32x32xf32>
    %cst = arith.constant dense<0.000000e+00> : vector<8x32xf32>
    %2 = tpu.matmul %0, %1, %cst {dimension_numbers = #tpu.dot_dimension_numbers<[1], [0], [0], [1], [0, 0, 1, 1], [], []>} : vector<8x32xf32>, vector<32x32xf32>, vector<8x32xf32> -> vector<8x32xf32>
    %c0_3 = arith.constant 0 : index
    %c0_4 = arith.constant 0 : index
    %3 = vector.load %arg3[%c0_3, %c0_4] : memref<1x32xf32, #tpu.memory_space<vmem>>, vector<1x32xf32>
    %4 = vector.broadcast %3 : vector<1x32xf32> to vector<8x32xf32>
    %5 = arith.addf %2, %4 : vector<8x32xf32>
    %c0_5 = arith.constant 0 : index
    %c0_6 = arith.constant 0 : index
    %6 = vector.load %arg4[%c0_5, %c0_6] : memref<1x32xf32, #tpu.memory_space<vmem>>, vector<1x32xf32>
    %c0_7 = arith.constant 0 : index
    %c0_8 = arith.constant 0 : index
    %7 = vector.load %arg5[%c0_7, %c0_8] : memref<1x32xf32, #tpu.memory_space<vmem>>, vector<1x32xf32>
    %cst_9 = arith.constant dense<0.000000e+00> : vector<8xf32>
    %8 = vector.multi_reduction <add>, %5, %cst_9 [1] : vector<8x32xf32> to vector<8xf32>
    %9 = vector.shape_cast %8 : vector<8xf32> to vector<8x1xf32>
    %cst_10 = arith.constant 3.200000e+01 : f32
    %10 = vector.broadcast %cst_10 : f32 to vector<8x1xf32>
    %11 = arith.divf %9, %10 : vector<8x1xf32>
    %12 = vector.broadcast %11 : vector<8x1xf32> to vector<8x32xf32>
    %13 = arith.subf %5, %12 : vector<8x32xf32>
    %14 = arith.mulf %13, %13 : vector<8x32xf32>
    %cst_11 = arith.constant dense<0.000000e+00> : vector<8xf32>
    %15 = vector.multi_reduction <add>, %14, %cst_11 [1] : vector<8x32xf32> to vector<8xf32>
    %16 = vector.shape_cast %15 : vector<8xf32> to vector<8x1xf32>
    %cst_12 = arith.constant 3.200000e+01 : f32
    %17 = vector.broadcast %cst_12 : f32 to vector<8x1xf32>
    %18 = arith.divf %16, %17 : vector<8x1xf32>
    %cst_13 = arith.constant 9.99999974E-6 : f32
    %19 = vector.broadcast %cst_13 : f32 to vector<8x1xf32>
    %20 = arith.addf %18, %19 : vector<8x1xf32>
    %21 = math.rsqrt %20 : vector<8x1xf32>
    %22 = vector.broadcast %21 : vector<8x1xf32> to vector<8x32xf32>
    %23 = vector.broadcast %6 : vector<1x32xf32> to vector<8x32xf32>
    %24 = arith.mulf %22, %23 : vector<8x32xf32>
    %25 = arith.mulf %13, %24 : vector<8x32xf32>
    %26 = vector.broadcast %7 : vector<1x32xf32> to vector<8x32xf32>
    %27 = arith.addf %25, %26 : vector<8x32xf32>
    %cst_14 = arith.constant 5.000000e-01 : f32
    %28 = vector.broadcast %cst_14 : f32 to vector<8x32xf32>
    %29 = arith.mulf %28, %27 : vector<8x32xf32>
    %cst_15 = arith.constant 0.707106769 : f32
    %30 = vector.broadcast %cst_15 : f32 to vector<8x32xf32>
    %31 = arith.mulf %27, %30 : vector<8x32xf32>
    %32 = math.erf %31 : vector<8x32xf32>
    %cst_16 = arith.constant 1.000000e+00 : f32
    %33 = vector.broadcast %cst_16 : f32 to vector<8x32xf32>
    %34 = arith.addf %33, %32 : vector<8x32xf32>
    %35 = arith.mulf %29, %34 : vector<8x32xf32>
    %c0_17 = arith.constant 0 : index
    %c0_18 = arith.constant 0 : index
    %36 = vector.load %arg6[%c0_17, %c0_18] : memref<32x16xf32, #tpu.memory_space<vmem>>, vector<32x16xf32>
    %cst_19 = arith.constant dense<0.000000e+00> : vector<8x16xf32>
    %37 = tpu.matmul %35, %36, %cst_19 {dimension_numbers = #tpu.dot_dimension_numbers<[1], [0], [0], [1], [0, 0, 1, 1], [], []>} : vector<8x32xf32>, vector<32x16xf32>, vector<8x16xf32> -> vector<8x16xf32>
    %c0_20 = arith.constant 0 : index
    %c0_21 = arith.constant 0 : index
    %38 = vector.load %arg7[%c0_20, %c0_21] : memref<1x16xf32, #tpu.memory_space<vmem>>, vector<1x16xf32>
    %39 = vector.broadcast %38 : vector<1x16xf32> to vector<8x16xf32>
    %40 = arith.addf %37, %39 : vector<8x16xf32>
    %c0_22 = arith.constant 0 : index
    %c0_23 = arith.constant 0 : index
    %41 = vector.load %arg8[%c0_22, %c0_23] : memref<1x16xf32, #tpu.memory_space<vmem>>, vector<1x16xf32>
    %c0_24 = arith.constant 0 : index
    %c0_25 = arith.constant 0 : index
    %42 = vector.load %arg9[%c0_24, %c0_25] : memref<1x16xf32, #tpu.memory_space<vmem>>, vector<1x16xf32>
    %cst_26 = arith.constant dense<0.000000e+00> : vector<8xf32>
    %43 = vector.multi_reduction <add>, %40, %cst_26 [1] : vector<8x16xf32> to vector<8xf32>
    %44 = vector.shape_cast %43 : vector<8xf32> to vector<8x1xf32>
    %cst_27 = arith.constant 1.600000e+01 : f32
    %45 = vector.broadcast %cst_27 : f32 to vector<8x1xf32>
    %46 = arith.divf %44, %45 : vector<8x1xf32>
    %47 = vector.broadcast %46 : vector<8x1xf32> to vector<8x16xf32>
    %48 = arith.subf %40, %47 : vector<8x16xf32>
    %49 = arith.mulf %48, %48 : vector<8x16xf32>
    %cst_28 = arith.constant dense<0.000000e+00> : vector<8xf32>
    %50 = vector.multi_reduction <add>, %49, %cst_28 [1] : vector<8x16xf32> to vector<8xf32>
    %51 = vector.shape_cast %50 : vector<8xf32> to vector<8x1xf32>
    %cst_29 = arith.constant 1.600000e+01 : f32
    %52 = vector.broadcast %cst_29 : f32 to vector<8x1xf32>
    %53 = arith.divf %51, %52 : vector<8x1xf32>
    %cst_30 = arith.constant 9.99999974E-6 : f32
    %54 = vector.broadcast %cst_30 : f32 to vector<8x1xf32>
    %55 = arith.addf %53, %54 : vector<8x1xf32>
    %56 = math.rsqrt %55 : vector<8x1xf32>
    %57 = vector.broadcast %56 : vector<8x1xf32> to vector<8x16xf32>
    %58 = vector.broadcast %41 : vector<1x16xf32> to vector<8x16xf32>
    %59 = arith.mulf %57, %58 : vector<8x16xf32>
    %60 = arith.mulf %48, %59 : vector<8x16xf32>
    %61 = vector.broadcast %42 : vector<1x16xf32> to vector<8x16xf32>
    %62 = arith.addf %60, %61 : vector<8x16xf32>
    %cst_31 = arith.constant 5.000000e-01 : f32
    %63 = vector.broadcast %cst_31 : f32 to vector<8x16xf32>
    %64 = arith.mulf %63, %62 : vector<8x16xf32>
    %cst_32 = arith.constant 0.707106769 : f32
    %65 = vector.broadcast %cst_32 : f32 to vector<8x16xf32>
    %66 = arith.mulf %62, %65 : vector<8x16xf32>
    %67 = math.erf %66 : vector<8x16xf32>
    %cst_33 = arith.constant 1.000000e+00 : f32
    %68 = vector.broadcast %cst_33 : f32 to vector<8x16xf32>
    %69 = arith.addf %68, %67 : vector<8x16xf32>
    %70 = arith.mulf %64, %69 : vector<8x16xf32>
    %c0_34 = arith.constant 0 : index
    %c0_35 = arith.constant 0 : index
    %71 = vector.load %arg10[%c0_34, %c0_35] : memref<16x128xf32, #tpu.memory_space<vmem>>, vector<16x128xf32>
    %cst_36 = arith.constant dense<0.000000e+00> : vector<8x128xf32>
    %72 = tpu.matmul %70, %71, %cst_36 {dimension_numbers = #tpu.dot_dimension_numbers<[1], [0], [0], [1], [0, 0, 1, 1], [], []>} : vector<8x16xf32>, vector<16x128xf32>, vector<8x128xf32> -> vector<8x128xf32>
    %73 = vector.extract_strided_slice %72 {offsets = [0, 0], sizes = [8, 4], strides = [1, 1]} : vector<8x128xf32> to vector<8x4xf32>
    %c0_37 = arith.constant 0 : index
    %c0_38 = arith.constant 0 : index
    %74 = vector.load %arg11[%c0_37, %c0_38] : memref<1x4xf32, #tpu.memory_space<vmem>>, vector<1x4xf32>
    %75 = vector.broadcast %74 : vector<1x4xf32> to vector<8x4xf32>
    %76 = arith.addf %73, %75 : vector<8x4xf32>
    %77 = tpu.iota {dimensions = array<i32: 1>} : vector<8x4xi32>
    %c2_i32 = arith.constant 2 : i32
    %78 = vector.broadcast %c2_i32 : i32 to vector<8x4xi32>
    %79 = arith.cmpi slt, %77, %78 : vector<8x4xi32>
    %80 = arith.negf %76 : vector<8x4xf32>
    %81 = math.exp %80 : vector<8x4xf32>
    %cst_39 = arith.constant 1.000000e+00 : f32
    %82 = vector.broadcast %cst_39 : f32 to vector<8x4xf32>
    %83 = arith.addf %82, %81 : vector<8x4xf32>
    %84 = arith.divf %82, %83 : vector<8x4xf32>
    %cst_40 = arith.constant 0.000000e+00 : f32
    %85 = vector.broadcast %cst_40 : f32 to vector<8x4xf32>
    %86 = arith.maximumf %76, %85 : vector<8x4xf32>
    %87 = vector.broadcast %cst_40 : f32 to vector<8x4xf32>
    %88 = arith.subf %76, %87 : vector<8x4xf32>
    %89 = arith.cmpf one, %88, %88 : vector<8x4xf32>
    %90 = vector.broadcast %cst_40 : f32 to vector<8x4xf32>
    %91 = arith.addf %76, %90 : vector<8x4xf32>
    %92 = math.absf %88 : vector<8x4xf32>
    %cst_41 = arith.constant 0.000000e+00 : f32
    %93 = vector.broadcast %cst_41 : f32 to vector<8x4xf32>
    %94 = arith.subf %93, %92 : vector<8x4xf32>
    %95 = math.exp %94 : vector<8x4xf32>
    %96 = math.log1p %95 : vector<8x4xf32>
    %97 = arith.addf %86, %96 : vector<8x4xf32>
    %98 = arith.select %89, %91, %97 : vector<8x4xi1>, vector<8x4xf32>
    %99 = arith.select %79, %84, %98 : vector<8x4xi1>, vector<8x4xf32>
    %c0_42 = arith.constant 0 : index
    %c0_43 = arith.constant 0 : index
    %100 = vector.load %arg12[%c0_42, %c0_43] : memref<8x4xf32, #tpu.memory_space<vmem>>, vector<8x4xf32>
    tpu.vector_store %arg12[%c0_42, %c0_43], %99 {strides = array<i32>} : memref<8x4xf32, #tpu.memory_space<vmem>>, vector<8x4xf32>,
    return
  }
  func.func @transform_0(%arg0: i32) -> (i32, i32) {
    %c0_i32 = arith.constant 0 : i32
    %c0_i32_0 = arith.constant 0 : i32
    return %arg0, %c0_i32 : i32, i32
  }
  func.func @transform_1(%arg0: i32) -> (i32, i32) {
    %c0_i32 = arith.constant 0 : i32
    %c0_i32_0 = arith.constant 0 : i32
    %c0_i32_1 = arith.constant 0 : i32
    return %c0_i32, %c0_i32_0 : i32, i32
  }
  func.func @transform_2(%arg0: i32) -> (i32, i32) {
    %c0_i32 = arith.constant 0 : i32
    %c0_i32_0 = arith.constant 0 : i32
    %c0_i32_1 = arith.constant 0 : i32
    return %c0_i32, %c0_i32_0 : i32, i32
  }
  func.func @transform_3(%arg0: i32) -> (i32, i32) {
    %c0_i32 = arith.constant 0 : i32
    %c0_i32_0 = arith.constant 0 : i32
    %c0_i32_1 = arith.constant 0 : i32
    return %c0_i32, %c0_i32_0 : i32, i32
  }
  func.func @transform_4(%arg0: i32) -> (i32, i32) {
    %c0_i32 = arith.constant 0 : i32
    %c0_i32_0 = arith.constant 0 : i32
    %c0_i32_1 = arith.constant 0 : i32
    return %c0_i32, %c0_i32_0 : i32, i32
  }
  func.func @transform_5(%arg0: i32) -> (i32, i32) {
    %c0_i32 = arith.constant 0 : i32
    %c0_i32_0 = arith.constant 0 : i32
    %c0_i32_1 = arith.constant 0 : i32
    return %c0_i32, %c0_i32_0 : i32, i32
  }
  func.func @transform_6(%arg0: i32) -> (i32, i32) {
    %c0_i32 = arith.constant 0 : i32
    %c0_i32_0 = arith.constant 0 : i32
    %c0_i32_1 = arith.constant 0 : i32
    return %c0_i32, %c0_i32_0 : i32, i32
  }
  func.func @transform_7(%arg0: i32) -> (i32, i32) {
    %c0_i32 = arith.constant 0 : i32
    %c0_i32_0 = arith.constant 0 : i32
    %c0_i32_1 = arith.constant 0 : i32
    return %c0_i32, %c0_i32_0 : i32, i32
  }
  func.func @transform_8(%arg0: i32) -> (i32, i32) {
    %c0_i32 = arith.constant 0 : i32
    %c0_i32_0 = arith.constant 0 : i32
    %c0_i32_1 = arith.constant 0 : i32
    return %c0_i32, %c0_i32_0 : i32, i32
  }
  func.func @transform_9(%arg0: i32) -> (i32, i32) {
    %c0_i32 = arith.constant 0 : i32
    %c0_i32_0 = arith.constant 0 : i32
    %c0_i32_1 = arith.constant 0 : i32
    return %c0_i32, %c0_i32_0 : i32, i32
  }
  func.func @transform_10(%arg0: i32) -> (i32, i32) {
    %c0_i32 = arith.constant 0 : i32
    %c0_i32_0 = arith.constant 0 : i32
    %c0_i32_1 = arith.constant 0 : i32
    return %c0_i32, %c0_i32_0 : i32, i32
  }
  func.func @transform_11(%arg0: i32) -> (i32, i32) {
    %c0_i32 = arith.constant 0 : i32
    %c0_i32_0 = arith.constant 0 : i32
    return %arg0, %c0_i32 : i32, i32
  }
}

</mosaic_0001>

<llo_original>
// kernel: tpu_custom_call.1
$region0: #{tpu_custom_call.1}
  #allocation0 [shape = 'u32[]', space=smem, size = 0x4, offset = 0x4, fixed_abs, tag = 'smem constant byte address 0x4 - core index']
  #allocation1 [shape = 'u32[144,128]{1,0:T(1,128)}', space=vmem, size = 0x12000, scoped, tag = 'internal scratch']
  %s0 = inlined_call_operand.hbm [shape: f32[8,32], index: 0, kind: input, shape index: {}]
  %s1 = inlined_call_operand.vmem [shape: f32[32,32], index: 1, kind: input, shape index: {}]
  %s2 = inlined_call_operand.vmem [shape: f32[1,32], index: 2, kind: input, shape index: {}]
  %s3 = inlined_call_operand.vmem [shape: f32[1,32], index: 3, kind: input, shape index: {}]
  %s4 = inlined_call_operand.vmem [shape: f32[1,32], index: 4, kind: input, shape index: {}]
  %s5 = inlined_call_operand.vmem [shape: f32[32,16], index: 5, kind: input, shape index: {}]
  %s6 = inlined_call_operand.vmem [shape: f32[1,16], index: 6, kind: input, shape index: {}]
  %s7 = inlined_call_operand.vmem [shape: f32[1,16], index: 7, kind: input, shape index: {}]
  %s8 = inlined_call_operand.vmem [shape: f32[1,16], index: 8, kind: input, shape index: {}]
  %s9 = inlined_call_operand.vmem [shape: f32[16,128], index: 9, kind: input, shape index: {}]
  %s10 = inlined_call_operand.vmem [shape: f32[1,4], index: 10, kind: input, shape index: {}]
  %s11 = inlined_call_operand.vmem [shape: f32[8,4], index: 11, kind: output, shape index: {}]
  %s12 = sld [smem:[#allocation0]]
  $region58: #{tpu_custom_call.1} parent=0
    _
  %s14 = ssub.s32 1, %s12
  %s15 = scalar_select 0, %s14, %s12
  $region1: #{tpu_custom_call.1} parent=0
    #allocation2 [shape = 'u8[4096]{0}', space=vmem, size = 0x1000, scoped, tag = 'input window, operand 0, single buffered']
    #allocation3 [shape = 's32[1]{0}', space=sflag, size = 0x4, scoped, tag = 'scoped memory for tpu_custom_call.1']
    %16 = vsyncpa [#allocation3], 0
    // Predicated region
    $region2: #{tpu_custom_call.1} parent=1 // pred_check
      _
    $region3: #{tpu_custom_call.1} parent=1 // pred_check_branch
      %18 = sbr.rel (0) target = $region5
    $region4: #{tpu_custom_call.1} parent=1 // pred_region
      %s20 = ssub.s32 128, 128
      %21 = vsyncadd [#allocation3], %s20
      %s23 = sshll.u32 [#allocation2], 4
      %s24 = int_to_ptr.vmem [resolvable:$true] %s23
      %26 = dma.hbm_to_vmem [thread:$0]  %s0, 128, %s24, [#allocation3]
    $region5: #{tpu_custom_call.1} parent=1 // pred_fallthru
      _
    // Predicated region
    $region6: #{tpu_custom_call.1} parent=1 // pred_check
      _
    $region7: #{tpu_custom_call.1} parent=1 // pred_check_branch
      %28 = sbr.rel (0) target = $region9
    $region8: #{tpu_custom_call.1} parent=1 // pred_region
      _
    $region9: #{tpu_custom_call.1} parent=1 // pred_fallthru
      _
    // Predicated region
    $region10: #{tpu_custom_call.1} parent=1 // pred_check
      _
    $region11: #{tpu_custom_call.1} parent=1 // pred_check_branch
      %30 = sbr.rel (0) target = $region13
    $region12: #{tpu_custom_call.1} parent=1 // pred_region
      _
    $region13: #{tpu_custom_call.1} parent=1 // pred_fallthru
      _
    // Predicated region
    $region14: #{tpu_custom_call.1} parent=1 // pred_check
      _
    $region15: #{tpu_custom_call.1} parent=1 // pred_check_branch
      %32 = sbr.rel (0) target = $region17
    $region16: #{tpu_custom_call.1} parent=1 // pred_region
      _
    $region17: #{tpu_custom_call.1} parent=1 // pred_fallthru
      _
    // Predicated region
    $region18: #{tpu_custom_call.1} parent=1 // pred_check
      _
    $region19: #{tpu_custom_call.1} parent=1 // pred_check_branch
      %34 = sbr.rel (0) target = $region21
    $region20: #{tpu_custom_call.1} parent=1 // pred_region
      _
    $region21: #{tpu_custom_call.1} parent=1 // pred_fallthru
      _
    // Predicated region
    $region22: #{tpu_custom_call.1} parent=1 // pred_check
      _
    $region23: #{tpu_custom_call.1} parent=1 // pred_check_branch
      %36 = sbr.rel (0) target = $region25
    $region24: #{tpu_custom_call.1} parent=1 // pred_region
      _
    $region25: #{tpu_custom_call.1} parent=1 // pred_fallthru
      _
    // Predicated region
    $region26: #{tpu_custom_call.1} parent=1 // pred_check
      _
    $region27: #{tpu_custom_call.1} parent=1 // pred_check_branch
      %38 = sbr.rel (0) target = $region29
    $region28: #{tpu_custom_call.1} parent=1 // pred_region
      _
    $region29: #{tpu_custom_call.1} parent=1 // pred_fallthru
      _
    // Predicated region
    $region30: #{tpu_custom_call.1} parent=1 // pred_check
      _
    $region31: #{tpu_custom_call.1} parent=1 // pred_check_branch
      %40 = sbr.rel (0) target = $region33
    $region32: #{tpu_custom_call.1} parent=1 // pred_region
      _
    $region33: #{tpu_custom_call.1} parent=1 // pred_fallthru
      _
    // Predicated region
    $region34: #{tpu_custom_call.1} parent=1 // pred_check
      _
    $region35: #{tpu_custom_call.1} parent=1 // pred_check_branch
      %42 = sbr.rel (0) target = $region37
    $region36: #{tpu_custom_call.1} parent=1 // pred_region
      _
    $region37: #{tpu_custom_call.1} parent=1 // pred_fallthru
      _
    // Predicated region
    $region38: #{tpu_custom_call.1} parent=1 // pred_check
      _
    $region39: #{tpu_custom_call.1} parent=1 // pred_check_branch
      %44 = sbr.rel (0) target = $region41
    $region40: #{tpu_custom_call.1} parent=1 // pred_region
      _
    $region41: #{tpu_custom_call.1} parent=1 // pred_fallthru
      _
    // Predicated region
    $region42: #{tpu_custom_call.1} parent=1 // pred_check
      _
    $region43: #{tpu_custom_call.1} parent=1 // pred_check_branch
      %46 = sbr.rel (0) target = $region45
    $region44: #{tpu_custom_call.1} parent=1 // pred_region
      _
    $region45: #{tpu_custom_call.1} parent=1 // pred_fallthru
      _
    // Predicated region
    $region46: #{tpu_custom_call.1} parent=1 // pred_check
      _
    $region47: #{tpu_custom_call.1} parent=1 // pred_check_branch
      %48 = sbr.rel (0) target = $region49
    $region48: #{tpu_custom_call.1} parent=1 // pred_region
      %49 = dma.done [#allocation3], 128
    $region49: #{tpu_custom_call.1} parent=1 // pred_fallthru
      _
    %v50 = vld [vmem:[#allocation2] sm:$0xff]
    %v51 = vld [vmem:[%s1] sm:$0xff]
    %v52 = vld [vmem:[%s1 + $0x8] sm:$0xff]
    %v53 = vld [vmem:[%s1 + $0x10] sm:$0xff]
    %v54 = vld [vmem:[%s1 + $0x18] sm:$0xff]
    %v55 = vld [vmem:[%s2] sm:$0x1]
    %v57 = vlaneseq
    %v58 = vshrl.u32 %v57, 7
    %v59 = vsub.s32 0, %v58
    %v60 = vrot.slane %v55, %v59
    %vm62 = vcmask 261120
    %v64 = vsel %vm62, %v50, 0
    %66 = vmatprep.subr.mxu0 0.0
    %67 = vmatpush1.msra.mxu0 0.0
    %68 = vmatprep.subr.mxu0 0.0
    %69 = vmatpush1.msra.mxu0 0.0
    %70 = vmatprep.subr.mxu0 0.0
    %71 = vmatpush1.msra.mxu0 0.0
    %72 = vmatprep.subr.mxu0 0.0
    %73 = vmatpush1.msra.mxu0 0.0
    %74 = vmatprep.subr.mxu0 0.0
    %75 = vmatpush1.msra.mxu0 0.0
    %76 = vmatprep.subr.mxu0 0.0
    %77 = vmatpush1.msra.mxu0 0.0
    %78 = vmatprep.subr.mxu0 0.0
    %79 = vmatpush1.msra.mxu0 0.0
    %80 = vmatprep.subr.mxu0 0.0
    %81 = vmatpush1.msra.mxu0 0.0
    %82 = vmatprep.subr.mxu0 0.0
    %83 = vmatpush1.msra.mxu0 0.0
    %84 = vmatprep.subr.mxu0 0.0
    %85 = vmatpush1.msra.mxu0 0.0
    %86 = vmatprep.subr.mxu0 0.0
    %87 = vmatpush1.msra.mxu0 0.0
    %88 = vmatprep.subr.mxu0 0.0
    %89 = vmatpush1.msra.mxu0 0.0
    %90 = vmatprep.subr.mxu0 0.0
    %91 = vmatpush1.msra.mxu0 %v54
    %92 = vmatprep.subr.mxu0 0.0
    %93 = vmatpush1.msra.mxu0 %v53
    %94 = vmatprep.subr.mxu0 0.0
    %95 = vmatpush1.msra.mxu0 %v52
    %96 = vmatprep.subr.mxu0 0.0
    %97 = vmatpush1.msra.mxu0 %v51
    %98 = vmatprep.subr.mxu0 0.0
    %99 = vmatpush2.msra.mxu0 0.0
    %100 = vmatprep.subr.mxu0 0.0
    %101 = vmatpush2.msra.mxu0 0.0
    %102 = vmatprep.subr.mxu0 0.0
    %103 = vmatpush2.msra.mxu0 0.0
    %104 = vmatprep.subr.mxu0 0.0
    %105 = vmatpush2.msra.mxu0 0.0
    %106 = vmatprep.subr.mxu0 0.0
    %107 = vmatpush2.msra.mxu0 0.0
    %108 = vmatprep.subr.mxu0 0.0
    %109 = vmatpush2.msra.mxu0 0.0
    %110 = vmatprep.subr.mxu0 0.0
    %111 = vmatpush2.msra.mxu0 0.0
    %112 = vmatprep.subr.mxu0 0.0
    %113 = vmatpush2.msra.mxu0 0.0
    %114 = vmatprep.subr.mxu0 0.0
    %115 = vmatpush2.msra.mxu0 0.0
    %116 = vmatprep.subr.mxu0 0.0
    %117 = vmatpush2.msra.mxu0 0.0
    %118 = vmatprep.subr.mxu0 0.0
    %119 = vmatpush2.msra.mxu0 0.0
    %120 = vmatprep.subr.mxu0 0.0
    %121 = vmatpush2.msra.mxu0 0.0
    %122 = vmatprep.subr.mxu0 0.0
    %123 = vmatpush2.msra.mxu0 0.0
    %124 = vmatprep.subr.mxu0 0.0
    %125 = vmatpush2.msra.mxu0 0.0
    %126 = vmatprep.subr.mxu0 0.0
    %127 = vmatpush2.msra.mxu0 0.0
    %128 = vmatprep.subr.mxu0 0.0
    %129 = vmatpush2.msra.mxu0 0.0
    %130 = vmatprep.mubr.f32.mxu0 0.0
    %131 = vmatmul.mubr.f32.gmra.mxu0 %v64
    %v132 = vpop.f32.mrf.mxu0
    %v133 = vadd.f32 %v60, %v132
    %v134 = vpop.f32.mrf.mxu0
    %135 = vdwg.mxu0
    %v136 = vld [vmem:[%s3] sm:$0x1]
    %v137 = vld [vmem:[%s4] sm:$0x1]
    %v138 = vsel %vm62, %v133, 0.0
    %139 = vadd.xlane.f32.xlu0 %v138
    %v140 = vpop.xlane.xlu0 %139
    %v141 = vrcp.pop 32.0
    %v142 = vmul.f32 %v140, %v141
    %v143 = vsub.f32 %v133, %v142
    %v144 = vmul.f32 %v143, %v143
    %v145 = vsel %vm62, %v144, 0.0
    %146 = vadd.xlane.f32.xlu0 %v145
    %v147 = vpop.xlane.xlu0 %146
    %v148 = vmul.f32 %v147, %v141
    %v149 = vadd.f32 %v148, 1e-05
    %v150 = vrsqrt.pop %v149
    %v152 = vlaneseq
    %v153 = vshrl.u32 %v152, 7
    %v154 = vsub.s32 0, %v153
    %v155 = vrot.slane %v136, %v154
    %v157 = vmul.f32 %v150, %v155
    %v158 = vmul.f32 %v143, %v157
    %v160 = vlaneseq
    %v161 = vshrl.u32 %v160, 7
    %v162 = vsub.s32 0, %v161
    %v163 = vrot.slane %v137, %v162
    %v165 = vadd.f32 %v158, %v163
    %v166 = vmul.f32 %v165, 0.5
    %v167 = vmul.f32 %v165, 0.70710677
    %v168 = verf.f32.pop %v167
    %v169 = vadd.f32 %v168, 1.0
    %v170 = vmul.f32 %v166, %v169
    %v171 = vld [vmem:[%s5] sm:$0xff]
    %v172 = vld [vmem:[%s5 + $0x8] sm:$0xff]
    %v173 = vld [vmem:[%s5 + $0x10] sm:$0xff]
    %v174 = vld [vmem:[%s5 + $0x18] sm:$0xff]
    %v175 = vld [vmem:[%s6] sm:$0x1]
    %v177 = vlaneseq
    %v178 = vshrl.u32 %v177, 7
    %v179 = vsub.s32 0, %v178
    %v180 = vrot.slane %v175, %v179
    %v183 = vsel %vm62, %v170, 0
    %185 = vmatprep.subr.mxu0 0.0
    %186 = vmatpush1.msra.mxu0 0.0
    %187 = vmatprep.subr.mxu0 0.0
    %188 = vmatpush1.msra.mxu0 0.0
    %189 = vmatprep.subr.mxu0 0.0
    %190 = vmatpush1.msra.mxu0 0.0
    %191 = vmatprep.subr.mxu0 0.0
    %192 = vmatpush1.msra.mxu0 0.0
    %193 = vmatprep.subr.mxu0 0.0
    %194 = vmatpush1.msra.mxu0 0.0
    %195 = vmatprep.subr.mxu0 0.0
    %196 = vmatpush1.msra.mxu0 0.0
    %197 = vmatprep.subr.mxu0 0.0
    %198 = vmatpush1.msra.mxu0 0.0
    %199 = vmatprep.subr.mxu0 0.0
    %200 = vmatpush1.msra.mxu0 0.0
    %201 = vmatprep.subr.mxu0 0.0
    %202 = vmatpush1.msra.mxu0 0.0
    %203 = vmatprep.subr.mxu0 0.0
    %204 = vmatpush1.msra.mxu0 0.0
    %205 = vmatprep.subr.mxu0 0.0
    %206 = vmatpush1.msra.mxu0 0.0
    %207 = vmatprep.subr.mxu0 0.0
    %208 = vmatpush1.msra.mxu0 0.0
    %209 = vmatprep.subr.mxu0 0.0
    %210 = vmatpush1.msra.mxu0 %v174
    %211 = vmatprep.subr.mxu0 0.0
    %212 = vmatpush1.msra.mxu0 %v173
    %213 = vmatprep.subr.mxu0 0.0
    %214 = vmatpush1.msra.mxu0 %v172
    %215 = vmatprep.subr.mxu0 0.0
    %216 = vmatpush1.msra.mxu0 %v171
    %217 = vmatprep.subr.mxu0 0.0
    %218 = vmatpush2.msra.mxu0 0.0
    %219 = vmatprep.subr.mxu0 0.0
    %220 = vmatpush2.msra.mxu0 0.0
    %221 = vmatprep.subr.mxu0 0.0
    %222 = vmatpush2.msra.mxu0 0.0
    %223 = vmatprep.subr.mxu0 0.0
    %224 = vmatpush2.msra.mxu0 0.0
    %225 = vmatprep.subr.mxu0 0.0
    %226 = vmatpush2.msra.mxu0 0.0
    %227 = vmatprep.subr.mxu0 0.0
    %228 = vmatpush2.msra.mxu0 0.0
    %229 = vmatprep.subr.mxu0 0.0
    %230 = vmatpush2.msra.mxu0 0.0
    %231 = vmatprep.subr.mxu0 0.0
    %232 = vmatpush2.msra.mxu0 0.0
    %233 = vmatprep.subr.mxu0 0.0
    %234 = vmatpush2.msra.mxu0 0.0
    %235 = vmatprep.subr.mxu0 0.0
    %236 = vmatpush2.msra.mxu0 0.0
    %237 = vmatprep.subr.mxu0 0.0
    %238 = vmatpush2.msra.mxu0 0.0
    %239 = vmatprep.subr.mxu0 0.0
    %240 = vmatpush2.msra.mxu0 0.0
    %241 = vmatprep.subr.mxu0 0.0
    %242 = vmatpush2.msra.mxu0 0.0
    %243 = vmatprep.subr.mxu0 0.0
    %244 = vmatpush2.msra.mxu0 0.0
    %245 = vmatprep.subr.mxu0 0.0
    %246 = vmatpush2.msra.mxu0 0.0
    %247 = vmatprep.subr.mxu0 0.0
    %248 = vmatpush2.msra.mxu0 0.0
    %249 = vmatprep.mubr.f32.mxu0 0.0
    %250 = vmatmul.mubr.f32.gmra.mxu0 %v183
    %v251 = vpop.f32.mrf.mxu0
    %v252 = vadd.f32 %v180, %v251
    %v253 = vpop.f32.mrf.mxu0
    %254 = vdwg.mxu0
    %v255 = vld [vmem:[%s7] sm:$0x1]
    %v256 = vld [vmem:[%s8] sm:$0x1]
    %vm257 = vcmask 130048
    %v258 = vsel %vm257, %v252, 0.0
    %259 = vadd.xlane.f32.xlu0 %v258
    %v260 = vpop.xlane.xlu0 %259
    %v261 = vrcp.pop 16.0
    %v262 = vmul.f32 %v260, %v261
    %v263 = vsub.f32 %v252, %v262
    %v264 = vmul.f32 %v263, %v263
    %v265 = vsel %vm257, %v264, 0.0
    %266 = vadd.xlane.f32.xlu0 %v265
    %v267 = vpop.xlane.xlu0 %266
    %v268 = vmul.f32 %v267, %v261
    %v269 = vadd.f32 %v268, 1e-05
    %v270 = vrsqrt.pop %v269
    %v272 = vlaneseq
    %v273 = vshrl.u32 %v272, 7
    %v274 = vsub.s32 0, %v273
    %v275 = vrot.slane %v255, %v274
    %v277 = vmul.f32 %v270, %v275
    %v278 = vmul.f32 %v263, %v277
    %v280 = vlaneseq
    %v281 = vshrl.u32 %v280, 7
    %v282 = vsub.s32 0, %v281
    %v283 = vrot.slane %v256, %v282
    %v285 = vadd.f32 %v278, %v283
    %v286 = vmul.f32 %v285, 0.5
    %v287 = vmul.f32 %v285, 0.70710677
    %v288 = verf.f32.pop %v287
    %v289 = vadd.f32 %v288, 1.0
    %v290 = vmul.f32 %v286, %v289
    %v291 = vld [vmem:[%s9] sm:$0xff]
    %v292 = vld [vmem:[%s9 + $0x8] sm:$0xff]
    %v294 = vsel %vm257, %v290, 0
    %296 = vmatprep.subr.mxu0 0.0
    %297 = vmatpush1.msra.mxu0 0.0
    %298 = vmatprep.subr.mxu0 0.0
    %299 = vmatpush1.msra.mxu0 0.0
    %300 = vmatprep.subr.mxu0 0.0
    %301 = vmatpush1.msra.mxu0 0.0
    %302 = vmatprep.subr.mxu0 0.0
    %303 = vmatpush1.msra.mxu0 0.0
    %304 = vmatprep.subr.mxu0 0.0
    %305 = vmatpush1.msra.mxu0 0.0
    %306 = vmatprep.subr.mxu0 0.0
    %307 = vmatpush1.msra.mxu0 0.0
    %308 = vmatprep.subr.mxu0 0.0
    %309 = vmatpush1.msra.mxu0 0.0
    %310 = vmatprep.subr.mxu0 0.0
    %311 = vmatpush1.msra.mxu0 0.0
    %312 = vmatprep.subr.mxu0 0.0
    %313 = vmatpush1.msra.mxu0 0.0
    %314 = vmatprep.subr.mxu0 0.0
    %315 = vmatpush1.msra.mxu0 0.0
    %316 = vmatprep.subr.mxu0 0.0
    %317 = vmatpush1.msra.mxu0 0.0
    %318 = vmatprep.subr.mxu0 0.0
    %319 = vmatpush1.msra.mxu0 0.0
    %320 = vmatprep.subr.mxu0 0.0
    %321 = vmatpush1.msra.mxu0 0.0
    %322 = vmatprep.subr.mxu0 0.0
    %323 = vmatpush1.msra.mxu0 0.0
    %324 = vmatprep.subr.mxu0 0.0
    %325 = vmatpush1.msra.mxu0 %v292
    %326 = vmatprep.subr.mxu0 0.0
    %327 = vmatpush1.msra.mxu0 %v291
    %328 = vmatprep.subr.mxu0 0.0
    %329 = vmatpush2.msra.mxu0 0.0
    %330 = vmatprep.subr.mxu0 0.0
    %331 = vmatpush2.msra.mxu0 0.0
    %332 = vmatprep.subr.mxu0 0.0
    %333 = vmatpush2.msra.mxu0 0.0
    %334 = vmatprep.subr.mxu0 0.0
    %335 = vmatpush2.msra.mxu0 0.0
    %336 = vmatprep.subr.mxu0 0.0
    %337 = vmatpush2.msra.mxu0 0.0
    %338 = vmatprep.subr.mxu0 0.0
    %339 = vmatpush2.msra.mxu0 0.0
    %340 = vmatprep.subr.mxu0 0.0
    %341 = vmatpush2.msra.mxu0 0.0
    %342 = vmatprep.subr.mxu0 0.0
    %343 = vmatpush2.msra.mxu0 0.0
    %344 = vmatprep.subr.mxu0 0.0
    %345 = vmatpush2.msra.mxu0 0.0
    %346 = vmatprep.subr.mxu0 0.0
    %347 = vmatpush2.msra.mxu0 0.0
    %348 = vmatprep.subr.mxu0 0.0
    %349 = vmatpush2.msra.mxu0 0.0
    %350 = vmatprep.subr.mxu0 0.0
    %351 = vmatpush2.msra.mxu0 0.0
    %352 = vmatprep.subr.mxu0 0.0
    %353 = vmatpush2.msra.mxu0 0.0
    %354 = vmatprep.subr.mxu0 0.0
    %355 = vmatpush2.msra.mxu0 0.0
    %356 = vmatprep.subr.mxu0 0.0
    %357 = vmatpush2.msra.mxu0 0.0
    %358 = vmatprep.subr.mxu0 0.0
    %359 = vmatpush2.msra.mxu0 0.0
    %360 = vmatprep.mubr.f32.mxu0 0.0
    %361 = vmatmul.mubr.f32.gmra.mxu0 %v294
    %v362 = vpop.f32.mrf.mxu0
    %v363 = vadd.f32 0.0, %v362
    %v364 = vpop.f32.mrf.mxu0
    %365 = vdwg.mxu0
    %v366 = vld [vmem:[%s10] sm:$0x1]
    %v368 = vlaneseq
    %v369 = vshrl.u32 %v368, 7
    %v370 = vsub.s32 0, %v369
    %v371 = vrot.slane %v366, %v370
    %v373 = vadd.f32 %v363, %v371
    %v374 = vlaneseq
    %v375 = vand.u32 %v374, 127
    %vm376 = vcmp.lt.s32.totalorder %v375, 2
    %v377 = vxor.u32 %v373, 2147483648
    %v378 = vmul.f32 %v377, 1.442695
    %v379 = vpow.pop %v378
    %v380 = vadd.f32 %v379, 1.0
    %v381 = vrcp.pop %v380
    %v382 = vmul.f32 1.0, %v381
    %v383 = vmax.f32 %v373, 0.0
    %vm384 = vcmp.ne.f32.partialorder %v373, %v373
    %v385 = vadd.f32 %v373, 0.0
    %v386 = vand.u32 2147483647, %v373
    %v387 = vsub.f32 0.0, %v386
    %v388 = vmul.f32 %v387, 1.442695
    %v389 = vpow.pop %v388
    %v390 = vadd.f32 %v389, 1.0
    %v391 = vlog2.pop %v390
    %v392 = vmul.f32 %v391, 0.6931472
    %v393 = vmul.f32 -0.5, %v389
    %v394 = vadd.f32 %v393, 1.0
    %v395 = vmul.f32 %v394, %v389
    %v396 = vand.u32 2147483647, %v389
    %vm397 = vcmp.lt.f32.partialorder %v396, 0.0004427343
    %v398 = vsel %vm397, %v395, %v392
    %v399 = vadd.f32 %v383, %v398
    %v400 = vsel %vm384, %v385, %v399
    %v401 = vsel %vm376, %v382, %v400
    %vm402 = vcmask 31744
    %403 = vst.msk [vmem:[%s11] sm:$0xff] %vm402, %v401
    // Predicated region
    $region50: #{tpu_custom_call.1} parent=1 // pred_check
      _
    $region51: #{tpu_custom_call.1} parent=1 // pred_check_branch
      %405 = sbr.rel (0) target = $region53
    $region52: #{tpu_custom_call.1} parent=1 // pred_region
      _
    $region53: #{tpu_custom_call.1} parent=1 // pred_fallthru
      _
    // Predicated region
    $region54: #{tpu_custom_call.1} parent=1 // pred_check
      _
    $region55: #{tpu_custom_call.1} parent=1 // pred_check_branch
      %407 = sbr.rel (0) target = $region57
    $region56: #{tpu_custom_call.1} parent=1 // pred_region
      _
    $region57: #{tpu_custom_call.1} parent=1 // pred_fallthru
      _
    %408 = vsyncpa [#allocation3], 1

</llo_original>
